<compile_context>
chip_gen: v7x
topology: tpu7x:2x2x1
jax: 0.10.0
libtpu: 0.0.40
codegen_flags: <defaults>
</compile_context>

<pallas_src>
import functools

import jax
import jax.numpy as jnp
from jax.experimental import pallas as pl
from jax.experimental.pallas import tpu as pltpu


def _outconv_kernel_vpu(x_ref, w_ref, b_ref, o_ref, *, c_in, c_out, tile_n):
    # x_ref: (tile_n, C_in, TILE_S)  VMEM (lane-dense spatial axis)
    # w_ref: (C_out, C_in)           SMEM (f32 scalars)
    # b_ref: (C_out,)                SMEM (f32 scalars)
    # o_ref: (tile_n, C_out, TILE_S) VMEM
    #
    # Tiny-channel contraction on the VPU: o[co,:] = b[co] + sum_ci w[co,ci] * x[ci,:].
    # SMEM scalar reads ride the scalar operand path (splat multiply/add), keeping only
    # (1, TILE_S) lane-dense rows live.
    for ni in range(tile_n):
        for co in range(c_out):
            row = x_ref[ni, 0:1, :].astype(jnp.float32) * w_ref[co, 0]
            for ci in range(1, c_in):
                row = row + x_ref[ni, ci:ci + 1, :].astype(jnp.float32) * w_ref[co, ci]
            o_ref[ni, co:co + 1, :] = (row + b_ref[co]).astype(o_ref.dtype)


def _outconv_kernel_mxu(x_ref, w_ref, b_ref, o_ref, *, tile_n):
    # x_ref: (tile_n, C_in, TILE_S)  VMEM
    # w_ref: (C_out, C_in)           VMEM
    # b_ref: (C_out, 1)              VMEM
    # o_ref: (tile_n, C_out, TILE_S) VMEM
    w = w_ref[...]
    b = b_ref[...].astype(jnp.float32)
    for ni in range(tile_n):
        acc = jnp.dot(w, x_ref[ni], preferred_element_type=jnp.float32)
        o_ref[ni] = (acc + b).astype(o_ref.dtype)


def _choose_tiles(n, c_in, c_out, s, dtype_bytes, tile_s_target):
    """Pick (tile_n, tile_s) so each grid step moves ~MiB-scale data, blocks fit VMEM,
    and there are >= 2 grid steps whenever the problem allows (v7x megacore)."""
    lane = 128
    target_step_bytes = 2 * 1024 * 1024       # ~2 MiB of x+out per grid step
    block_vmem_budget = 16 * 1024 * 1024      # all pipelined block buffers

    def block_bytes(tn, ts):
        # x + out, double-buffered by the pipeline (weights/bias negligible).
        return 2 * tn * (c_in + c_out) * ts * dtype_bytes

    s128 = pl.cdiv(s, lane) * lane

    # Spatial tile: lane-dense (multiple of 128), as large as target / VMEM budget allow.
    tile_s = max(lane, (min(tile_s_target, s128) // lane) * lane)
    while tile_s > lane and block_bytes(1, tile_s) > block_vmem_budget:
        tile_s = max(lane, ((tile_s // 2) // lane) * lane)
    num_s_tiles = pl.cdiv(s, tile_s)           # ragged last tile handled by masking

    # Batch folding: when one spatial tile covers all of S (small H*W), fold batch
    # elements into the block so each step still moves ~target_step_bytes.
    tile_n = 1
    if num_s_tiles == 1 and n > 1:
        per_batch = (c_in + c_out) * tile_s * dtype_bytes
        tile_n = max(1, min(n, target_step_bytes // max(1, per_batch)))
        # bound the in-kernel unroll and the VMEM block size
        tile_n = min(tile_n, 64, max(1, 1024 // max(1, c_in * c_out)))
        while tile_n > 1 and block_bytes(tile_n, tile_s) > block_vmem_budget:
            tile_n -= 1
        while n % tile_n != 0:                 # keep blocks aligned to the batch axis
            tile_n -= 1

    # v7x megacore: ensure >= 2 grid steps when possible so both TCs get work.
    if (n // tile_n) * num_s_tiles < 2:
        if tile_n > 1:
            tile_n = tile_n // 2
            while n % tile_n != 0:
                tile_n -= 1
        elif num_s_tiles == 1 and tile_s > lane:
            tile_s = max(lane, ((tile_s // 2) // lane) * lane)
            num_s_tiles = pl.cdiv(s, tile_s)

    return tile_n, tile_s, n // tile_n, num_s_tiles


@functools.partial(jax.jit, static_argnames=("tile_s_target",))
def outconv(x_nchw, weight, bias, *, tile_s_target=32768):
    """1x1 Conv2d forward, matching nn.Conv2d(in_c, out_c, kernel_size=1).

    x_nchw: (N, C_in, H, W); weight: (C_out, C_in, 1, 1); bias: (C_out,)
    returns (N, C_out, H, W)
    """
    n, c_in, h, w = x_nchw.shape
    c_out = weight.shape[0]
    s = h * w
    dtype_bytes = jnp.dtype(x_nchw.dtype).itemsize

    # Free reshape (collapse H, W) — no transpose, no pad, no extra HBM pass.
    x_ncs = x_nchw.reshape(n, c_in, s)

    tile_n, tile_s, num_n_tiles, num_s_tiles = _choose_tiles(
        n, c_in, c_out, s, dtype_bytes, tile_s_target)

    # MXU once the contraction/output are wide enough that the unrolled VPU chain would
    # bind on the 4 VALU slots (worst on v5e); tiny channels stay on the VPU+SMEM path.
    # Note: very large c_in would additionally want a c_in ("arbitrary") reduction axis;
    # here the VMEM budget is respected by shrinking tile_s instead.
    use_mxu = (c_in >= 32) or (c_out >= 16)

    if use_mxu:
        kernel = functools.partial(_outconv_kernel_mxu, tile_n=tile_n)
        w_arg = weight.reshape(c_out, c_in)
        b_arg = bias.reshape(c_out, 1)
        w_spec = pl.BlockSpec((c_out, c_in), lambda bi, si: (0, 0))
        b_spec = pl.BlockSpec((c_out, 1), lambda bi, si: (0, 0))
    else:
        kernel = functools.partial(_outconv_kernel_vpu,
                                   c_in=c_in, c_out=c_out, tile_n=tile_n)
        # f32 scalars in SMEM (SMEM is 32-bit word memory; also keeps v5e off bf16 VPU math)
        w_arg = weight.reshape(c_out, c_in).astype(jnp.float32)
        b_arg = bias.astype(jnp.float32)
        w_spec = pl.BlockSpec(memory_space=pltpu.MemorySpace.SMEM)
        b_spec = pl.BlockSpec(memory_space=pltpu.MemorySpace.SMEM)

    out_ncs = pl.pallas_call(
        kernel,
        out_shape=jax.ShapeDtypeStruct((n, c_out, s), x_nchw.dtype),
        grid_spec=pltpu.PrefetchScalarGridSpec(
            num_scalar_prefetch=0,
            grid=(num_n_tiles, num_s_tiles),
            in_specs=[
                pl.BlockSpec((tile_n, c_in, tile_s), lambda bi, si: (bi, 0, si)),
                w_spec,
                b_spec,
            ],
            out_specs=pl.BlockSpec((tile_n, c_out, tile_s),
                                   lambda bi, si: (bi, 0, si)),
        ),
        compiler_params=pltpu.CompilerParams(
            # Both axes independent -> megacore sharding on v7x (>= 2 steps guaranteed
            # by tile selection whenever the problem size allows).
            dimension_semantics=("parallel", "parallel"),
            # Blocks are budgeted <= 16 MiB; 32 MiB scoped limit is safe on v5e/v6e/v7x.
            vmem_limit_bytes=32 * 1024 * 1024,
        ),
    )(x_ncs, w_arg, b_arg)

    return out_ncs.reshape(n, c_out, h, w)


if __name__ == "__main__":
    # Small shapes consistent with the module: batch=2, in_channels=4,
    # out_channels=3, spatial=16x16.
    N, C_IN, C_OUT, H, W = 2, 4, 3, 16, 16

    key = jax.random.PRNGKey(0)
    kx, kw, kb = jax.random.split(key, 3)

    x = jax.random.normal(kx, (N, C_IN, H, W), dtype=jnp.float32)
    # Deterministic synthetic parameters (shapes match nn.Conv2d(C_IN, C_OUT, 1)).
    weight = jax.random.normal(kw, (C_OUT, C_IN, 1, 1), dtype=jnp.float32) * 0.1
    bias = jax.random.normal(kb, (C_OUT,), dtype=jnp.float32) * 0.1

    y = outconv(x, weight, bias)
    y = jax.block_until_ready(y)

    # Reference check against plain-JAX 1x1 conv semantics.
    ref = jnp.einsum("nchw,oc->nohw", x, weight.reshape(C_OUT, C_IN)) + bias[
        None, :, None, None
    ]
    assert y.shape == (N, C_OUT, H, W)
    assert jnp.allclose(y, ref, atol=1e-5, rtol=1e-5)

    print("KERNEL_OK")
</pallas_src>

<mosaic_0001>
module attributes {stable_mosaic.version = 11 : i64} {
  func.func @_outconv_kernel_vpu(%arg0: i32, %arg1: i32, %arg2: memref<1x4x256xf32, #tpu.memory_space<vmem>>, %arg3: memref<3x4xf32, #tpu.memory_space<smem>>, %arg4: memref<3xf32, #tpu.memory_space<smem>>, %arg5: memref<1x3x256xf32, #tpu.memory_space<vmem>>) attributes {dimension_semantics = [#tpu.dimension_semantics<parallel>, #tpu.dimension_semantics<parallel>], iteration_bounds = array<i64: 2, 1>, scalar_prefetch = 0 : i64, scratch_operands = 0 : i64, tpu.core_type = #tpu.core_type<tc>, window_params = [{transform_indices = @transform_0, window_bounds = array<i64: 1, 4, 256>}, {transform_indices = @transform_1, window_bounds = array<i64: 3, 4>}, {transform_indices = @transform_2, window_bounds = array<i64: 3>}, {transform_indices = @transform_3, window_bounds = array<i64: 1, 3, 256>}]} {
    %c0 = arith.constant 0 : index
    %c0_0 = arith.constant 0 : index
    %c0_1 = arith.constant 0 : index
    %0 = vector.load %arg2[%c0, %c0_0, %c0_1] : memref<1x4x256xf32, #tpu.memory_space<vmem>>, vector<1x1x256xf32>
    %1 = vector.shape_cast %0 : vector<1x1x256xf32> to vector<1x256xf32>
    %c0_2 = arith.constant 0 : index
    %c0_3 = arith.constant 0 : index
    %2 = memref.load %arg3[%c0_2, %c0_3] : memref<3x4xf32, #tpu.memory_space<smem>>
    %3 = vector.broadcast %2 : f32 to vector<1x256xf32>
    %4 = arith.mulf %1, %3 : vector<1x256xf32>
    %c0_4 = arith.constant 0 : index
    %c1 = arith.constant 1 : index
    %c0_5 = arith.constant 0 : index
    %5 = vector.load %arg2[%c0_4, %c1, %c0_5] : memref<1x4x256xf32, #tpu.memory_space<vmem>>, vector<1x1x256xf32>
    %6 = vector.shape_cast %5 : vector<1x1x256xf32> to vector<1x256xf32>
    %c0_6 = arith.constant 0 : index
    %c1_7 = arith.constant 1 : index
    %7 = memref.load %arg3[%c0_6, %c1_7] : memref<3x4xf32, #tpu.memory_space<smem>>
    %8 = vector.broadcast %7 : f32 to vector<1x256xf32>
    %9 = arith.mulf %6, %8 : vector<1x256xf32>
    %10 = arith.addf %4, %9 : vector<1x256xf32>
    %c0_8 = arith.constant 0 : index
    %c2 = arith.constant 2 : index
    %c0_9 = arith.constant 0 : index
    %11 = vector.load %arg2[%c0_8, %c2, %c0_9] : memref<1x4x256xf32, #tpu.memory_space<vmem>>, vector<1x1x256xf32>
    %12 = vector.shape_cast %11 : vector<1x1x256xf32> to vector<1x256xf32>
    %c0_10 = arith.constant 0 : index
    %c2_11 = arith.constant 2 : index
    %13 = memref.load %arg3[%c0_10, %c2_11] : memref<3x4xf32, #tpu.memory_space<smem>>
    %14 = vector.broadcast %13 : f32 to vector<1x256xf32>
    %15 = arith.mulf %12, %14 : vector<1x256xf32>
    %16 = arith.addf %10, %15 : vector<1x256xf32>
    %c0_12 = arith.constant 0 : index
    %c3 = arith.constant 3 : index
    %c0_13 = arith.constant 0 : index
    %17 = vector.load %arg2[%c0_12, %c3, %c0_13] : memref<1x4x256xf32, #tpu.memory_space<vmem>>, vector<1x1x256xf32>
    %18 = vector.shape_cast %17 : vector<1x1x256xf32> to vector<1x256xf32>
    %c0_14 = arith.constant 0 : index
    %c3_15 = arith.constant 3 : index
    %19 = memref.load %arg3[%c0_14, %c3_15] : memref<3x4xf32, #tpu.memory_space<smem>>
    %20 = vector.broadcast %19 : f32 to vector<1x256xf32>
    %21 = arith.mulf %18, %20 : vector<1x256xf32>
    %22 = arith.addf %16, %21 : vector<1x256xf32>
    %c0_16 = arith.constant 0 : index
    %23 = memref.load %arg4[%c0_16] : memref<3xf32, #tpu.memory_space<smem>>
    %24 = vector.broadcast %23 : f32 to vector<1x256xf32>
    %25 = arith.addf %22, %24 : vector<1x256xf32>
    %c0_17 = arith.constant 0 : index
    %c0_18 = arith.constant 0 : index
    %c0_19 = arith.constant 0 : index
    %26 = vector.load %arg5[%c0_17, %c0_18, %c0_19] : memref<1x3x256xf32, #tpu.memory_space<vmem>>, vector<1x1x256xf32>
    %27 = vector.shape_cast %26 : vector<1x1x256xf32> to vector<1x256xf32>
    %28 = vector.shape_cast %25 : vector<1x256xf32> to vector<1x1x256xf32>
    tpu.vector_store %arg5[%c0_17, %c0_18, %c0_19], %28 {strides = array<i32>} : memref<1x3x256xf32, #tpu.memory_space<vmem>>, vector<1x1x256xf32>,
    %c0_20 = arith.constant 0 : index
    %c0_21 = arith.constant 0 : index
    %c0_22 = arith.constant 0 : index
    %29 = vector.load %arg2[%c0_20, %c0_21, %c0_22] : memref<1x4x256xf32, #tpu.memory_space<vmem>>, vector<1x1x256xf32>
    %30 = vector.shape_cast %29 : vector<1x1x256xf32> to vector<1x256xf32>
    %c1_23 = arith.constant 1 : index
    %c0_24 = arith.constant 0 : index
    %31 = memref.load %arg3[%c1_23, %c0_24] : memref<3x4xf32, #tpu.memory_space<smem>>
    %32 = vector.broadcast %31 : f32 to vector<1x256xf32>
    %33 = arith.mulf %30, %32 : vector<1x256xf32>
    %c0_25 = arith.constant 0 : index
    %c1_26 = arith.constant 1 : index
    %c0_27 = arith.constant 0 : index
    %34 = vector.load %arg2[%c0_25, %c1_26, %c0_27] : memref<1x4x256xf32, #tpu.memory_space<vmem>>, vector<1x1x256xf32>
    %35 = vector.shape_cast %34 : vector<1x1x256xf32> to vector<1x256xf32>
    %c1_28 = arith.constant 1 : index
    %c1_29 = arith.constant 1 : index
    %36 = memref.load %arg3[%c1_28, %c1_29] : memref<3x4xf32, #tpu.memory_space<smem>>
    %37 = vector.broadcast %36 : f32 to vector<1x256xf32>
    %38 = arith.mulf %35, %37 : vector<1x256xf32>
    %39 = arith.addf %33, %38 : vector<1x256xf32>
    %c0_30 = arith.constant 0 : index
    %c2_31 = arith.constant 2 : index
    %c0_32 = arith.constant 0 : index
    %40 = vector.load %arg2[%c0_30, %c2_31, %c0_32] : memref<1x4x256xf32, #tpu.memory_space<vmem>>, vector<1x1x256xf32>
    %41 = vector.shape_cast %40 : vector<1x1x256xf32> to vector<1x256xf32>
    %c1_33 = arith.constant 1 : index
    %c2_34 = arith.constant 2 : index
    %42 = memref.load %arg3[%c1_33, %c2_34] : memref<3x4xf32, #tpu.memory_space<smem>>
    %43 = vector.broadcast %42 : f32 to vector<1x256xf32>
    %44 = arith.mulf %41, %43 : vector<1x256xf32>
    %45 = arith.addf %39, %44 : vector<1x256xf32>
    %c0_35 = arith.constant 0 : index
    %c3_36 = arith.constant 3 : index
    %c0_37 = arith.constant 0 : index
    %46 = vector.load %arg2[%c0_35, %c3_36, %c0_37] : memref<1x4x256xf32, #tpu.memory_space<vmem>>, vector<1x1x256xf32>
    %47 = vector.shape_cast %46 : vector<1x1x256xf32> to vector<1x256xf32>
    %c1_38 = arith.constant 1 : index
    %c3_39 = arith.constant 3 : index
    %48 = memref.load %arg3[%c1_38, %c3_39] : memref<3x4xf32, #tpu.memory_space<smem>>
    %49 = vector.broadcast %48 : f32 to vector<1x256xf32>
    %50 = arith.mulf %47, %49 : vector<1x256xf32>
    %51 = arith.addf %45, %50 : vector<1x256xf32>
    %c1_40 = arith.constant 1 : index
    %52 = memref.load %arg4[%c1_40] : memref<3xf32, #tpu.memory_space<smem>>
    %53 = vector.broadcast %52 : f32 to vector<1x256xf32>
    %54 = arith.addf %51, %53 : vector<1x256xf32>
    %c0_41 = arith.constant 0 : index
    %c1_42 = arith.constant 1 : index
    %c0_43 = arith.constant 0 : index
    %55 = vector.load %arg5[%c0_41, %c1_42, %c0_43] : memref<1x3x256xf32, #tpu.memory_space<vmem>>, vector<1x1x256xf32>
    %56 = vector.shape_cast %55 : vector<1x1x256xf32> to vector<1x256xf32>
    %57 = vector.shape_cast %54 : vector<1x256xf32> to vector<1x1x256xf32>
    tpu.vector_store %arg5[%c0_41, %c1_42, %c0_43], %57 {strides = array<i32>} : memref<1x3x256xf32, #tpu.memory_space<vmem>>, vector<1x1x256xf32>,
    %c0_44 = arith.constant 0 : index
    %c0_45 = arith.constant 0 : index
    %c0_46 = arith.constant 0 : index
    %58 = vector.load %arg2[%c0_44, %c0_45, %c0_46] : memref<1x4x256xf32, #tpu.memory_space<vmem>>, vector<1x1x256xf32>
    %59 = vector.shape_cast %58 : vector<1x1x256xf32> to vector<1x256xf32>
    %c2_47 = arith.constant 2 : index
    %c0_48 = arith.constant 0 : index
    %60 = memref.load %arg3[%c2_47, %c0_48] : memref<3x4xf32, #tpu.memory_space<smem>>
    %61 = vector.broadcast %60 : f32 to vector<1x256xf32>
    %62 = arith.mulf %59, %61 : vector<1x256xf32>
    %c0_49 = arith.constant 0 : index
    %c1_50 = arith.constant 1 : index
    %c0_51 = arith.constant 0 : index
    %63 = vector.load %arg2[%c0_49, %c1_50, %c0_51] : memref<1x4x256xf32, #tpu.memory_space<vmem>>, vector<1x1x256xf32>
    %64 = vector.shape_cast %63 : vector<1x1x256xf32> to vector<1x256xf32>
    %c2_52 = arith.constant 2 : index
    %c1_53 = arith.constant 1 : index
    %65 = memref.load %arg3[%c2_52, %c1_53] : memref<3x4xf32, #tpu.memory_space<smem>>
    %66 = vector.broadcast %65 : f32 to vector<1x256xf32>
    %67 = arith.mulf %64, %66 : vector<1x256xf32>
    %68 = arith.addf %62, %67 : vector<1x256xf32>
    %c0_54 = arith.constant 0 : index
    %c2_55 = arith.constant 2 : index
    %c0_56 = arith.constant 0 : index
    %69 = vector.load %arg2[%c0_54, %c2_55, %c0_56] : memref<1x4x256xf32, #tpu.memory_space<vmem>>, vector<1x1x256xf32>
    %70 = vector.shape_cast %69 : vector<1x1x256xf32> to vector<1x256xf32>
    %c2_57 = arith.constant 2 : index
    %c2_58 = arith.constant 2 : index
    %71 = memref.load %arg3[%c2_57, %c2_58] : memref<3x4xf32, #tpu.memory_space<smem>>
    %72 = vector.broadcast %71 : f32 to vector<1x256xf32>
    %73 = arith.mulf %70, %72 : vector<1x256xf32>
    %74 = arith.addf %68, %73 : vector<1x256xf32>
    %c0_59 = arith.constant 0 : index
    %c3_60 = arith.constant 3 : index
    %c0_61 = arith.constant 0 : index
    %75 = vector.load %arg2[%c0_59, %c3_60, %c0_61] : memref<1x4x256xf32, #tpu.memory_space<vmem>>, vector<1x1x256xf32>
    %76 = vector.shape_cast %75 : vector<1x1x256xf32> to vector<1x256xf32>
    %c2_62 = arith.constant 2 : index
    %c3_63 = arith.constant 3 : index
    %77 = memref.load %arg3[%c2_62, %c3_63] : memref<3x4xf32, #tpu.memory_space<smem>>
    %78 = vector.broadcast %77 : f32 to vector<1x256xf32>
    %79 = arith.mulf %76, %78 : vector<1x256xf32>
    %80 = arith.addf %74, %79 : vector<1x256xf32>
    %c2_64 = arith.constant 2 : index
    %81 = memref.load %arg4[%c2_64] : memref<3xf32, #tpu.memory_space<smem>>
    %82 = vector.broadcast %81 : f32 to vector<1x256xf32>
    %83 = arith.addf %80, %82 : vector<1x256xf32>
    %c0_65 = arith.constant 0 : index
    %c2_66 = arith.constant 2 : index
    %c0_67 = arith.constant 0 : index
    %84 = vector.load %arg5[%c0_65, %c2_66, %c0_67] : memref<1x3x256xf32, #tpu.memory_space<vmem>>, vector<1x1x256xf32>
    %85 = vector.shape_cast %84 : vector<1x1x256xf32> to vector<1x256xf32>
    %86 = vector.shape_cast %83 : vector<1x256xf32> to vector<1x1x256xf32>
    tpu.vector_store %arg5[%c0_65, %c2_66, %c0_67], %86 {strides = array<i32>} : memref<1x3x256xf32, #tpu.memory_space<vmem>>, vector<1x1x256xf32>,
    return
  }
  func.func @transform_0(%arg0: i32, %arg1: i32) -> (i32, i32, i32) {
    %c0_i32 = arith.constant 0 : i32
    %c0_i32_0 = arith.constant 0 : i32
    return %arg0, %c0_i32, %arg1 : i32, i32, i32
  }
  func.func @transform_1(%arg0: i32, %arg1: i32) -> (i32, i32) {
    %c0_i32 = arith.constant 0 : i32
    %c0_i32_0 = arith.constant 0 : i32
    %c0_i32_1 = arith.constant 0 : i32
    return %c0_i32, %c0_i32_0 : i32, i32
  }
  func.func @transform_2(%arg0: i32, %arg1: i32) -> i32 {
    %c0_i32 = arith.constant 0 : i32
    %c0_i32_0 = arith.constant 0 : i32
    return %c0_i32 : i32
  }
  func.func @transform_3(%arg0: i32, %arg1: i32) -> (i32, i32, i32) {
    %c0_i32 = arith.constant 0 : i32
    %c0_i32_0 = arith.constant 0 : i32
    return %arg0, %c0_i32, %arg1 : i32, i32, i32
  }
}

</mosaic_0001>

<llo_original>
// kernel: outconv.1
$region0: #{outconv.1}
  #allocation0 [shape = 'u32[]', space=smem, size = 0x4, offset = 0x4, fixed_abs, tag = 'smem constant byte address 0x4 - core index']
  #allocation1 [shape = 'u32[144,128]{1,0:T(1,128)}', space=vmem, size = 0x12000, scoped, tag = 'internal scratch']
  %s0 = inlined_call_operand.vmem [shape: f32[2,4,256], index: 0, kind: input, shape index: {}]
  %s1 = inlined_call_operand.vmem [shape: f32[3,4], index: 1, kind: input, shape index: {}]
  %s2 = inlined_call_operand.vmem [shape: f32[3], index: 2, kind: input, shape index: {}]
  %s3 = inlined_call_operand.vmem [shape: f32[2,3,256], index: 3, kind: output, shape index: {}]
  %s4 = sld [smem:[#allocation0]]
  $region53: #{outconv.1} parent=0
    _
  %s6 = ssub.s32 1, %s4
  %s7 = scalar_select 0, %s6, %s4
  $region1: #{outconv.1} parent=0
    #allocation2 [shape = 'u8[2048]{0}', space=smem, size = 0x800, scoped, tag = 'input window, operand 1, single buffered']
    #allocation3 [shape = 's32[2]{0}', space=sflag, size = 0x8, scoped, tag = 'scoped memory for outconv.1']
    #allocation4 [shape = 'u8[512]{0}', space=smem, size = 0x200, scoped, tag = 'input window, operand 2, single buffered']
    #allocation5 [shape = 's32[1]{0}', space=sflag, size = 0x4, scoped, tag = 'scoped memory for outconv.1']
    %8 = vsyncpa [#allocation3], 0
    %9 = vsyncpa [#allocation5], 0
    loop: start=0, step=1, limit=4
    $region2: #{outconv.1} parent=1 // loop_pre_header
      _
    $region3: #{outconv.1} parent=1 // loop_header
      %s11 = sphi 0, %s15
      %p12 = scmp.ge.s32.totalorder %s11, 4
      %s18 = sphi 0, %s30
      %s19 = sphi 0, %s26
      %s20 = sphi 0, %s18
      %s21 = sphi 0, %s19
      %s22 = sphi 0, %s20
      %s23 = sphi 0, %s21
      %s35 = sphi 0, %s37
      %s38 = sphi 0, %s35
      %s39 = sphi 0, %s38
      %s55 = sphi 0, %s39
      %s59 = sphi 0, %s59
      %s61 = sphi 0, %s59
      %s62 = sphi 0, %s61
      %s76 = sphi 0, %s62
      %s80 = sphi 0, %s80
      %s82 = sphi 0, %s80
      %s83 = sphi 0, %s82
      %s97 = sphi 0, %s83
      %s105 = sphi 0, %s107
      %s108 = sphi 0, %s105
      %s109 = sphi 0, %s108
      %s125 = sphi 0, %s109
    $region4: #{outconv.1} parent=1 // loop_header_branch
      %14 = sbr.rel (%p12) target = $region8
    $region5: #{outconv.1} parent=1 // loop_body
      %s16 = ssub.s32 %s11, 1
      %s17 = ssub.s32 %s11, 2
      %s24 = sadd.s32 1, %s19
      %p25 = scmp.ge.s32.totalorder %s24, 1
      %s26 = scalar_select %p25, 0, %s24
      %s27 = sadd.s32 1, %s18
      %s28 = scalar_select %p25, %s27, %s18
      %p29 = scmp.ge.s32.totalorder %s28, 2
      %s30 = scalar_select %p29, 0, %s28
      %s31 = ssub.s32 %s18, %s30
      %s32 = ssub.s32 %s19, %s26
      %s33 = sor.u32 %s31, %s32
      %p34 = scmp.eq.s32.totalorder %s33, 0
      %s36 = sadd.s32 %s35, 1
      %s37 = scalar_select %p34, %s35, %s36
      %p40 = pneg %p34
      %p41 = scmp.eq.s32.totalorder %s11, 1
      %p42 = por %p40, %p41
      %p43 = scmp.ne.s32.totalorder %s35, %s38
      %p44 = scmp.eq.s32.totalorder %s11, 0
      %p45 = por %p43, %p44
      %p46 = scmp.ne.s32.totalorder %s35, %s38
      %p47 = scmp.eq.s32.totalorder %s16, 1
      %p48 = por %p46, %p47
      %p49 = scmp.ne.s32.totalorder %s38, %s39
      %p50 = scmp.eq.s32.totalorder %s16, 0
      %p51 = por %p49, %p50
      %p52 = scmp.ne.s32.totalorder %s38, %s39
      %p53 = scmp.eq.s32.totalorder %s17, 1
      %p54 = por %p52, %p53
      %p56 = scmp.ne.s32.totalorder %s39, %s55
      %p57 = scmp.eq.s32.totalorder %s17, 0
      %p58 = por %p56, %p57
      %s60 = sadd.s32 %s59, 1
      %p63 = scmp.eq.s32.totalorder %s11, 1
      %p64 = scmp.ne.s32.totalorder %s59, %s61
      %p65 = scmp.eq.s32.totalorder %s11, 0
      %p66 = por %p64, %p65
      %p67 = scmp.ne.s32.totalorder %s59, %s61
      %p68 = scmp.eq.s32.totalorder %s16, 1
      %p69 = por %p67, %p68
      %p70 = scmp.ne.s32.totalorder %s61, %s62
      %p71 = scmp.eq.s32.totalorder %s16, 0
      %p72 = por %p70, %p71
      %p73 = scmp.ne.s32.totalorder %s61, %s62
      %p74 = scmp.eq.s32.totalorder %s17, 1
      %p75 = por %p73, %p74
      %p77 = scmp.ne.s32.totalorder %s62, %s76
      %p78 = scmp.eq.s32.totalorder %s17, 0
      %p79 = por %p77, %p78
      %s81 = sadd.s32 %s80, 1
      %p84 = scmp.eq.s32.totalorder %s11, 1
      %p85 = scmp.ne.s32.totalorder %s80, %s82
      %p86 = scmp.eq.s32.totalorder %s11, 0
      %p87 = por %p85, %p86
      %p88 = scmp.ne.s32.totalorder %s80, %s82
      %p89 = scmp.eq.s32.totalorder %s16, 1
      %p90 = por %p88, %p89
      %p91 = scmp.ne.s32.totalorder %s82, %s83
      %p92 = scmp.eq.s32.totalorder %s16, 0
      %p93 = por %p91, %p92
      %p94 = scmp.ne.s32.totalorder %s82, %s83
      %p95 = scmp.eq.s32.totalorder %s17, 1
      %p96 = por %p94, %p95
      %p98 = scmp.ne.s32.totalorder %s83, %s97
      %p99 = scmp.eq.s32.totalorder %s17, 0
      %p100 = por %p98, %p99
      %s101 = ssub.s32 %s18, %s30
      %s102 = ssub.s32 %s19, %s26
      %s103 = sor.u32 %s101, %s102
      %p104 = scmp.eq.s32.totalorder %s103, 0
      %s106 = sadd.s32 %s105, 1
      %s107 = scalar_select %p104, %s105, %s106
      %p110 = pneg %p104
      %p111 = scmp.eq.s32.totalorder %s11, 1
      %p112 = por %p110, %p111
      %p113 = scmp.ne.s32.totalorder %s105, %s108
      %p114 = scmp.eq.s32.totalorder %s11, 0
      %p115 = por %p113, %p114
      %p116 = scmp.ne.s32.totalorder %s105, %s108
      %p117 = scmp.eq.s32.totalorder %s16, 1
      %p118 = por %p116, %p117
      %p119 = scmp.ne.s32.totalorder %s108, %s109
      %p120 = scmp.eq.s32.totalorder %s16, 0
      %p121 = por %p119, %p120
      %p122 = scmp.ne.s32.totalorder %s108, %s109
      %p123 = scmp.eq.s32.totalorder %s17, 1
      %p124 = por %p122, %p123
      %p126 = scmp.ne.s32.totalorder %s109, %s125
      %p127 = scmp.eq.s32.totalorder %s17, 0
      %p128 = por %p126, %p127
      %p129 = scmp.le.s32.totalorder 1, %s11
      %p130 = scmp.lt.s32.totalorder %s11, 3
      %p131 = pnand %p129, %p130
      %p132 = pneg %p131
      // Predicated region
      $region9: #{outconv.1} parent=5 // pred_check
        _
      $region10: #{outconv.1} parent=5 // pred_check_branch
        %134 = sbr.rel (%p131) target = $region12
      $region11: #{outconv.1} parent=5 // pred_region
        %s135 = ssub.s32 %s11, 1
        // Predicated region
        $region13: #{outconv.1} parent=11 // pred_check
          %p136 = pneg %p72
        $region14: #{outconv.1} parent=11 // pred_check_branch
          %138 = sbr.rel (%p136) target = $region16
        $region15: #{outconv.1} parent=11 // pred_region
          %s140 = ssub.s32 64, 64
          %141 = vsyncadd [#allocation3], %s140
          %s143 = sshll.u32 %s1, 4
          %s144 = int_to_ptr.vmem [resolvable:$true] %s143
          %146 = dma.vmem_to_smem %s144, 64, [#allocation2], [#allocation3]
        $region16: #{outconv.1} parent=11 // pred_fallthru
          _
        // Predicated region
        $region17: #{outconv.1} parent=11 // pred_check
          %p147 = pneg %p93
        $region18: #{outconv.1} parent=11 // pred_check_branch
          %149 = sbr.rel (%p147) target = $region20
        $region19: #{outconv.1} parent=11 // pred_region
          %s151 = ssub.s32 16, 16
          %152 = vsyncadd [#allocation5], %s151
          %s154 = sshll.u32 %s2, 4
          %s155 = int_to_ptr.vmem [resolvable:$true] %s154
          %157 = dma.vmem_to_smem %s155, 16, [#allocation4], [#allocation5]
        $region20: #{outconv.1} parent=11 // pred_fallthru
          _
      $region12: #{outconv.1} parent=5 // pred_fallthru
        _
      %p158 = scmp.lt.s32.totalorder %s11, 2
      // Predicated region
      $region21: #{outconv.1} parent=5 // pred_check
        %p159 = pneg %p158
      $region22: #{outconv.1} parent=5 // pred_check_branch
        %161 = sbr.rel (%p159) target = $region24
      $region23: #{outconv.1} parent=5 // pred_region
        // Predicated region
        $region25: #{outconv.1} parent=23 // pred_check
          %p162 = pneg %p45
        $region26: #{outconv.1} parent=23 // pred_check_branch
          %164 = sbr.rel (%p162) target = $region28
        $region27: #{outconv.1} parent=23 // pred_region
          %s165 = smul.u32 2, %s19
          %p166 = scmp.lt.s32.totalorder %s18, 1
          %s167 = scalar_select %p166, %s18, 1
          %p168 = scmp.lt.s32.totalorder %s165, 1
          %s169 = scalar_select %p168, %s165, 1
          %s170 = smul.addr %s167, 2
          %s171 = sadd.s32 %s169, %s170
          %s172 = smul.addr %s171, 4
          %s173 = scalar_lea.vmem %s0, %s172
          %s174 = smul.u32 2, %s19
        $region28: #{outconv.1} parent=23 // pred_fallthru
          _
      $region24: #{outconv.1} parent=5 // pred_fallthru
        _
      %p175 = scmp.le.s32.totalorder 1, %s11
      %p176 = scmp.lt.s32.totalorder %s11, 3
      %p177 = pnand %p175, %p176
      %p178 = pneg %p177
      // Predicated region
      $region29: #{outconv.1} parent=5 // pred_check
        _
      $region30: #{outconv.1} parent=5 // pred_check_branch
        %180 = sbr.rel (%p177) target = $region32
      $region31: #{outconv.1} parent=5 // pred_region
        %s181 = ssub.s32 %s11, 1
        // Predicated region
        $region33: #{outconv.1} parent=31 // pred_check
          %p182 = pneg %p72
        $region34: #{outconv.1} parent=31 // pred_check_branch
          %184 = sbr.rel (%p182) target = $region36
        $region35: #{outconv.1} parent=31 // pred_region
          %185 = dma.done [#allocation3], 64
        $region36: #{outconv.1} parent=31 // pred_fallthru
          _
        // Predicated region
        $region37: #{outconv.1} parent=31 // pred_check
          %p186 = pneg %p93
        $region38: #{outconv.1} parent=31 // pred_check_branch
          %188 = sbr.rel (%p186) target = $region40
        $region39: #{outconv.1} parent=31 // pred_region
          %189 = dma.done [#allocation5], 16
        $region40: #{outconv.1} parent=31 // pred_fallthru
          _
        %190 = sfence
        %s191 = smul.u32 2, %s21
        %p192 = scmp.lt.s32.totalorder %s20, 1
        %s193 = scalar_select %p192, %s20, 1
        %p194 = scmp.lt.s32.totalorder %s191, 1
        %s195 = scalar_select %p194, %s191, 1
        %s196 = smul.addr %s193, 2
        %s197 = sadd.s32 %s195, %s196
        %s198 = smul.addr %s197, 4
        %s199 = scalar_lea.vmem %s0, %s198
        %p200 = pneg %p51
        %p201 = pneg %p48
        %p202 = pneg %p72
        %p203 = pneg %p69
        %p204 = pneg %p93
        %p205 = pneg %p90
        %p206 = pneg %p121
        %p207 = pneg %p118
        %s208 = smul.u32 2, %s21
        %p209 = scmp.lt.s32.totalorder %s20, 1
        %s210 = scalar_select %p209, %s20, 1
        %p211 = scmp.lt.s32.totalorder %s208, 1
        %s212 = scalar_select %p211, %s208, 1
        %s213 = smul.addr %s210, 2
        %s214 = sadd.s32 %s212, %s213
        %s215 = smul.addr %s214, 4
        %s216 = scalar_lea.vmem %s3, %s215
        %s217 = smul.u32 2, %s21
        %p218 = scmp.lt.s32.totalorder %s20, 1
        %s219 = scalar_select %p218, %s20, 1
        %p220 = scmp.lt.s32.totalorder %s217, 1
        %s221 = scalar_select %p220, %s217, 1
        %s222 = smul.addr %s219, 2
        %s223 = sadd.s32 %s221, %s222
        %s224 = smul.addr %s223, 4
        %s225 = scalar_lea.vmem %s0, %s224
        %s226 = smul.u32 2, %s21
        %s227 = smul.u32 2, %s21
        %p228 = scmp.lt.s32.totalorder %s20, 1
        %s229 = scalar_select %p228, %s20, 1
        %p230 = scmp.lt.s32.totalorder %s227, 1
        %s231 = scalar_select %p230, %s227, 1
        %s232 = smul.addr %s229, 2
        %s233 = sadd.s32 %s231, %s232
        %s234 = smul.addr %s233, 4
        %s235 = scalar_lea.vmem %s3, %s234
        %s236 = smul.u32 2, %s21
        %v237 = vld [vmem:[%s225] ss:$4 sm:$0x3]
        %s238 = sld [smem:[#allocation2]]
        %v239 = vstv %s238
        %v240 = vmul.f32 %v237, %v239
        %s241 = scalar_lea.vmem %s225, 1
        %v242 = vld [vmem:[%s241] ss:$4 sm:$0x3]
        %s243 = sld [smem:[#allocation2 + $0x1]]
        %v244 = vstv %s243
        %v245 = vmul.f32 %v242, %v244
        %v246 = vadd.f32 %v240, %v245
        %s247 = scalar_lea.vmem %s225, 2
        %v248 = vld [vmem:[%s247] ss:$4 sm:$0x3]
        %s249 = sld [smem:[#allocation2 + $0x2]]
        %v250 = vstv %s249
        %v251 = vmul.f32 %v248, %v250
        %v252 = vadd.f32 %v246, %v251
        %s253 = scalar_lea.vmem %s225, 3
        %v254 = vld [vmem:[%s253] ss:$4 sm:$0x3]
        %s255 = sld [smem:[#allocation2 + $0x3]]
        %v256 = vstv %s255
        %v257 = vmul.f32 %v254, %v256
        %v258 = vadd.f32 %v252, %v257
        %s259 = sld [smem:[#allocation4]]
        %v260 = vstv %s259
        %v261 = vadd.f32 %v258, %v260
        %v262 = vlaneseq
        %vm263 = vcmp.ge.s32.totalorder %v262, 0
        %vm264 = vcmp.lt.s32.totalorder %v262, 256
        %vm265 = vmand %vm263, %vm264
        %266 = vst.msk [vmem:[%s235] ss:$4 sm:$0x3] %vm265, %v261
        %v267 = vld [vmem:[%s225] ss:$4 sm:$0x3]
        %s268 = sld [smem:[#allocation2 + $0x80]]
        %v269 = vstv %s268
        %v270 = vmul.f32 %v267, %v269
        %v271 = vld [vmem:[%s241] ss:$4 sm:$0x3]
        %s272 = sld [smem:[#allocation2 + $0x81]]
        %v273 = vstv %s272
        %v274 = vmul.f32 %v271, %v273
        %v275 = vadd.f32 %v270, %v274
        %v276 = vld [vmem:[%s247] ss:$4 sm:$0x3]
        %s277 = sld [smem:[#allocation2 + $0x82]]
        %v278 = vstv %s277
        %v279 = vmul.f32 %v276, %v278
        %v280 = vadd.f32 %v275, %v279
        %v281 = vld [vmem:[%s253] ss:$4 sm:$0x3]
        %s282 = sld [smem:[#allocation2 + $0x83]]
        %v283 = vstv %s282
        %v284 = vmul.f32 %v281, %v283
        %v285 = vadd.f32 %v280, %v284
        %s286 = sld [smem:[#allocation4 + $0x1]]
        %v287 = vstv %s286
        %v288 = vadd.f32 %v285, %v287
        %s289 = scalar_lea.vmem %s235, 1
        %290 = vst.msk [vmem:[%s289] ss:$4 sm:$0x3] %vm265, %v288
        %v291 = vld [vmem:[%s225] ss:$4 sm:$0x3]
        %s292 = sld [smem:[#allocation2 + $0x100]]
        %v293 = vstv %s292
        %v294 = vmul.f32 %v291, %v293
        %v295 = vld [vmem:[%s241] ss:$4 sm:$0x3]
        %s296 = sld [smem:[#allocation2 + $0x101]]
        %v297 = vstv %s296
        %v298 = vmul.f32 %v295, %v297
        %v299 = vadd.f32 %v294, %v298
        %v300 = vld [vmem:[%s247] ss:$4 sm:$0x3]
        %s301 = sld [smem:[#allocation2 + $0x102]]
        %v302 = vstv %s301
        %v303 = vmul.f32 %v300, %v302
        %v304 = vadd.f32 %v299, %v303
        %v305 = vld [vmem:[%s253] ss:$4 sm:$0x3]
        %s306 = sld [smem:[#allocation2 + $0x103]]
        %v307 = vstv %s306
        %v308 = vmul.f32 %v305, %v307
        %v309 = vadd.f32 %v304, %v308
        %s310 = sld [smem:[#allocation4 + $0x2]]
        %v311 = vstv %s310
        %v312 = vadd.f32 %v309, %v311
        %s313 = scalar_lea.vmem %s235, 2
        %314 = vst.msk [vmem:[%s313] ss:$4 sm:$0x3] %vm265, %v312
        %s315 = smul.u32 2, %s21
        %p316 = scmp.lt.s32.totalorder %s20, 1
        %s317 = scalar_select %p316, %s20, 1
        %p318 = scmp.lt.s32.totalorder %s315, 1
        %s319 = scalar_select %p318, %s315, 1
        %s320 = smul.addr %s317, 2
        %s321 = sadd.s32 %s319, %s320
        %s322 = smul.addr %s321, 4
        %s323 = scalar_lea.vmem %s3, %s322
        // Predicated region
        $region41: #{outconv.1} parent=31 // pred_check
          %p324 = pneg %p118
        $region42: #{outconv.1} parent=31 // pred_check_branch
          %326 = sbr.rel (%p324) target = $region44
        $region43: #{outconv.1} parent=31 // pred_region
          %s327 = smul.u32 2, %s21
        $region44: #{outconv.1} parent=31 // pred_fallthru
          _
      $region32: #{outconv.1} parent=5 // pred_fallthru
        _
      %p328 = scmp.le.s32.totalorder 2, %s11
      // Predicated region
      $region45: #{outconv.1} parent=5 // pred_check
        %p329 = pneg %p328
      $region46: #{outconv.1} parent=5 // pred_check_branch
        %331 = sbr.rel (%p329) target = $region48
      $region47: #{outconv.1} parent=5 // pred_region
        %s332 = ssub.s32 %s11, 2
        // Predicated region
        $region49: #{outconv.1} parent=47 // pred_check
          %p333 = pneg %p124
        $region50: #{outconv.1} parent=47 // pred_check_branch
          %335 = sbr.rel (%p333) target = $region52
        $region51: #{outconv.1} parent=47 // pred_region
          %s336 = smul.u32 2, %s23
          %p337 = scmp.lt.s32.totalorder %s22, 1
          %s338 = scalar_select %p337, %s22, 1
          %p339 = scmp.lt.s32.totalorder %s336, 1
          %s340 = scalar_select %p339, %s336, 1
          %s341 = smul.addr %s338, 2
          %s342 = sadd.s32 %s340, %s341
          %s343 = smul.addr %s342, 4
          %s344 = scalar_lea.vmem %s3, %s343
        $region52: #{outconv.1} parent=47 // pred_fallthru
          _
      $region48: #{outconv.1} parent=5 // pred_fallthru
        _
    $region6: #{outconv.1} parent=1 // loop_footer
      %s15 = sadd.s32 1, %s11
    $region7: #{outconv.1} parent=1 // loop_footer_branch
      %10 = sbr.rel target = $region3
    $region8: #{outconv.1} parent=1 // loop_exit
      _
    %345 = vsyncpa [#allocation3], 1
    %s346 = scalar_lea.sflag [#allocation3], 1
    %347 = vsyncpa %s346, 1
    %348 = vsyncpa [#allocation5], 1

</llo_original>
